<compile_context>
chip_gen: v6e
topology: v6e:2x2x1
jax: 0.10.0
libtpu: 0.0.40
codegen_flags: <defaults>
</compile_context>

<pallas_src>
import functools

import jax
import jax.numpy as jnp
from jax.experimental import pallas as pl
from jax.experimental.pallas import tpu as pltpu


def _round_up(a, b):
    return (a + b - 1) // b * b


def _sublane(dtype):
    # sub-32-bit dtypes pack along sublanes: f32 -> 8, bf16 -> 16, int8/fp8 -> 32
    return max(8, 32 // jnp.dtype(dtype).itemsize)


def _ls_tile_kernel(x_ref, t_ref, o_ref, *, confidence, low, class_num,
                    tile_rows, total_rows):
    """o[0] = sum over valid rows b of  sum_c true_dist[b,c] * log_softmax(x)[b,c]."""
    x = x_ref[...].astype(jnp.float32)                            # (tb, C)

    # numerically-stable log-softmax pieces (logprobs never materialized)
    m = jnp.max(x, axis=-1, keepdims=True)                        # (tb, 1)
    z = x - m                                                     # (tb, C)
    lse = jnp.log(jnp.sum(jnp.exp(z), axis=-1, keepdims=True))    # (tb, 1)

    # lane-dense target row -> (tb, 1) column (XLU relayout; XLU is idle here)
    t_col = jnp.transpose(t_ref[0], (1, 0))                       # (1,tb) -> (tb,1)

    # merged weighted reduction: sum_c (low + (conf-low)*onehot_c) * z
    col = jax.lax.broadcasted_iota(jnp.int32, x.shape, 1)         # (tb, C)
    w = jnp.where(col == t_col, jnp.float32(confidence), jnp.float32(low))
    wsum = jnp.sum(w * z, axis=-1, keepdims=True)                 # (tb, 1)

    dist_sum = low * (class_num - 1) + confidence                 # == 1.0
    per_row = wsum - jnp.float32(dist_sum) * lse                  # (tb, 1)

    # mask rows past the true batch: the last block may be partial and its tail
    # rows hold unspecified data; jnp.where (a select) blocks any NaN/Inf there.
    row = jax.lax.broadcasted_iota(jnp.int32, per_row.shape, 0)
    valid = row < (total_rows - pl.program_id(0) * tile_rows)
    per_row = jnp.where(valid, per_row, 0.0)

    o_ref[0] = jnp.sum(per_row, axis=0, keepdims=True)            # (1, 1)


def label_smoothing_loss(x, target, *, class_num=40, smoothing=0.01,
                         max_rows_per_tile=4096):
    """Pallas implementation of LabelSmoothingLoss.forward(x, target) for 2-D x."""
    # TODO(synk): the PyTorch `smoothing is None` branch (plain nn.CrossEntropyLoss)
    # is not implemented; only the default label-smoothing path is translated.
    B, C = x.shape
    assert C == class_num
    confidence = 1.0 - smoothing
    low = smoothing / (class_num - 1)

    sub = _sublane(x.dtype)

    # Batch tiling: >=2 grid steps when the batch allows it (v7x has 2 TCs and
    # the "parallel" axis shards across them); tile rows are a dtype-aware
    # sublane multiple.  x itself is never padded — ragged tails are masked
    # in-kernel.
    n_tiles = pl.cdiv(B, max_rows_per_tile)
    if n_tiles == 1 and B > 2 * sub:
        n_tiles = 2
    tb = _round_up(pl.cdiv(B, n_tiles), sub)
    n_tiles = pl.cdiv(B, tb)
    Bp = n_tiles * tb

    # Targets: lane-dense (n_tiles, 1, tb) layout -> one contiguous DMA per tile.
    t = target.astype(jnp.int32).reshape(B)
    if Bp != B:
        t = jnp.pad(t, (0, Bp - B))        # tiny (B*4 bytes); x is NOT padded
    t = t.reshape(n_tiles, 1, tb)

    partials = pl.pallas_call(
        functools.partial(
            _ls_tile_kernel,
            confidence=confidence,
            low=low,
            class_num=class_num,
            tile_rows=tb,
            total_rows=B,
        ),
        out_shape=jax.ShapeDtypeStruct((n_tiles, 1, 1), jnp.float32),
        grid_spec=pltpu.PrefetchScalarGridSpec(
            num_scalar_prefetch=0,
            grid=(n_tiles,),
            in_specs=[
                pl.BlockSpec((tb, C), lambda i: (i, 0)),          # logits (native dtype)
                pl.BlockSpec((1, 1, tb), lambda i: (i, 0, 0)),    # lane-dense targets
            ],
            out_specs=pl.BlockSpec((1, 1, 1), lambda i: (i, 0, 0)),  # per-tile scalar
        ),
        compiler_params=pltpu.CompilerParams(
            dimension_semantics=("parallel",),                    # disjoint output blocks
            vmem_limit_bytes=32 * 1024 * 1024,
        ),
    )(x, t)

    # PyTorch divides by x.size(-2) == batch.
    return -jnp.sum(partials) / B


def _reference(x, target, class_num=40, smoothing=0.01):
    """Pure-JAX reference mirroring the PyTorch forward, for validation."""
    confidence = 1.0 - smoothing
    low = smoothing / (class_num - 1)
    true_dist = jnp.full(x.shape, low, dtype=jnp.float32)
    true_dist = true_dist.at[jnp.arange(x.shape[0]), target].set(confidence)
    logprobs = jax.nn.log_softmax(x.astype(jnp.float32), axis=-1)
    return -jnp.sum(true_dist * logprobs) / x.shape[-2]


if __name__ == "__main__":
    class_num = 40
    smoothing = 0.01

    key = jax.random.PRNGKey(0)
    k1, k2, k3, k4 = jax.random.split(key, 4)

    # Case 1: small batch, single tile, no tail masking.
    x1 = jax.random.normal(k1, (8, class_num), dtype=jnp.float32)
    t1 = jax.random.randint(k2, (8,), 0, class_num, dtype=jnp.int32)
    loss1 = jax.block_until_ready(
        label_smoothing_loss(x1, t1, class_num=class_num, smoothing=smoothing))
    ref1 = _reference(x1, t1, class_num=class_num, smoothing=smoothing)
    assert jnp.allclose(loss1, ref1, rtol=1e-5, atol=1e-5), (loss1, ref1)

    # Case 2: ragged batch -> 2 tiles (parallel axis) + in-kernel tail masking.
    x2 = jax.random.normal(k3, (20, class_num), dtype=jnp.float32)
    t2 = jax.random.randint(k4, (20,), 0, class_num, dtype=jnp.int32)
    loss2 = jax.block_until_ready(
        label_smoothing_loss(x2, t2, class_num=class_num, smoothing=smoothing))
    ref2 = _reference(x2, t2, class_num=class_num, smoothing=smoothing)
    assert jnp.allclose(loss2, ref2, rtol=1e-5, atol=1e-5), (loss2, ref2)

    print("KERNEL_OK")
</pallas_src>

<mosaic_0001>
module attributes {stable_mosaic.version = 11 : i64} {
  func.func @_ls_tile_kernel(%arg0: i32, %arg1: memref<8x40xf32, #tpu.memory_space<vmem>>, %arg2: memref<1x1x8xi32, #tpu.memory_space<vmem>>, %arg3: memref<1x1x1xf32, #tpu.memory_space<vmem>>) attributes {dimension_semantics = [#tpu.dimension_semantics<parallel>], iteration_bounds = array<i64: 1>, scalar_prefetch = 0 : i64, scratch_operands = 0 : i64, tpu.core_type = #tpu.core_type<tc>, window_params = [{transform_indices = @transform_0, window_bounds = array<i64: 8, 40>}, {transform_indices = @transform_1, window_bounds = array<i64: 1, 1, 8>}, {transform_indices = @transform_2, window_bounds = array<i64: 1, 1, 1>}]} {
    %c0 = arith.constant 0 : index
    %c0_0 = arith.constant 0 : index
    %0 = vector.load %arg1[%c0, %c0_0] : memref<8x40xf32, #tpu.memory_space<vmem>>, vector<8x40xf32>
    %cst = arith.constant dense<0xFF800000> : vector<8xf32>
    %1 = vector.multi_reduction <maximumf>, %0, %cst [1] : vector<8x40xf32> to vector<8xf32>
    %2 = vector.shape_cast %1 : vector<8xf32> to vector<8x1xf32>
    %3 = vector.broadcast %2 : vector<8x1xf32> to vector<8x40xf32>
    %4 = arith.subf %0, %3 : vector<8x40xf32>
    %5 = math.exp %4 : vector<8x40xf32>
    %cst_1 = arith.constant dense<0.000000e+00> : vector<8xf32>
    %6 = vector.multi_reduction <add>, %5, %cst_1 [1] : vector<8x40xf32> to vector<8xf32>
    %7 = vector.shape_cast %6 : vector<8xf32> to vector<8x1xf32>
    %8 = math.log %7 : vector<8x1xf32>
    %c0_2 = arith.constant 0 : index
    %c0_3 = arith.constant 0 : index
    %c0_4 = arith.constant 0 : index
    %9 = vector.load %arg2[%c0_2, %c0_3, %c0_4] : memref<1x1x8xi32, #tpu.memory_space<vmem>>, vector<1x1x8xi32>
    %10 = vector.shape_cast %9 : vector<1x1x8xi32> to vector<1x8xi32>
    %11 = tpu.transpose %10, [1, 0] : vector<1x8xi32> -> vector<8x1xi32>
    %12 = tpu.iota {dimensions = array<i32: 1>} : vector<8x40xi32>
    %13 = vector.broadcast %11 : vector<8x1xi32> to vector<8x40xi32>
    %14 = arith.cmpi eq, %12, %13 : vector<8x40xi32>
    %cst_5 = arith.constant 9.900000e-01 : f32
    %cst_6 = arith.constant 2.56410247E-4 : f32
    %15 = vector.broadcast %cst_5 : f32 to vector<8x40xf32>
    %16 = vector.broadcast %cst_6 : f32 to vector<8x40xf32>
    %17 = arith.select %14, %15, %16 : vector<8x40xi1>, vector<8x40xf32>
    %18 = arith.mulf %17, %4 : vector<8x40xf32>
    %cst_7 = arith.constant dense<0.000000e+00> : vector<8xf32>
    %19 = vector.multi_reduction <add>, %18, %cst_7 [1] : vector<8x40xf32> to vector<8xf32>
    %20 = vector.shape_cast %19 : vector<8xf32> to vector<8x1xf32>
    %cst_8 = arith.constant 1.000000e+00 : f32
    %21 = vector.broadcast %cst_8 : f32 to vector<8x1xf32>
    %22 = arith.mulf %21, %8 : vector<8x1xf32>
    %23 = arith.subf %20, %22 : vector<8x1xf32>
    %24 = tpu.iota {dimensions = array<i32: 0>} : vector<8x1xi32>
    %c8_i32 = arith.constant 8 : i32
    %25 = arith.muli %arg0, %c8_i32 : i32
    %c8_i32_9 = arith.constant 8 : i32
    %26 = arith.subi %c8_i32_9, %25 : i32
    %27 = vector.broadcast %26 : i32 to vector<8x1xi32>
    %28 = arith.cmpi slt, %24, %27 : vector<8x1xi32>
    %cst_10 = arith.constant 0.000000e+00 : f32
    %29 = vector.broadcast %cst_10 : f32 to vector<8x1xf32>
    %30 = arith.select %28, %23, %29 : vector<8x1xi1>, vector<8x1xf32>
    %cst_11 = arith.constant dense<0.000000e+00> : vector<1xf32>
    %31 = vector.multi_reduction <add>, %30, %cst_11 [0] : vector<8x1xf32> to vector<1xf32>
    %32 = vector.shape_cast %31 : vector<1xf32> to vector<1x1xf32>
    %c0_12 = arith.constant 0 : index
    %c0_13 = arith.constant 0 : index
    %c0_14 = arith.constant 0 : index
    %33 = vector.load %arg3[%c0_12, %c0_13, %c0_14] : memref<1x1x1xf32, #tpu.memory_space<vmem>>, vector<1x1x1xf32>
    %34 = vector.shape_cast %33 : vector<1x1x1xf32> to vector<1x1xf32>
    %35 = vector.shape_cast %32 : vector<1x1xf32> to vector<1x1x1xf32>
    tpu.vector_store %arg3[%c0_12, %c0_13, %c0_14], %35 {strides = array<i32>} : memref<1x1x1xf32, #tpu.memory_space<vmem>>, vector<1x1x1xf32>,
    return
  }
  func.func @transform_0(%arg0: i32) -> (i32, i32) {
    %c0_i32 = arith.constant 0 : i32
    %c0_i32_0 = arith.constant 0 : i32
    return %arg0, %c0_i32 : i32, i32
  }
  func.func @transform_1(%arg0: i32) -> (i32, i32, i32) {
    %c0_i32 = arith.constant 0 : i32
    %c0_i32_0 = arith.constant 0 : i32
    %c0_i32_1 = arith.constant 0 : i32
    return %arg0, %c0_i32, %c0_i32_0 : i32, i32, i32
  }
  func.func @transform_2(%arg0: i32) -> (i32, i32, i32) {
    %c0_i32 = arith.constant 0 : i32
    %c0_i32_0 = arith.constant 0 : i32
    %c0_i32_1 = arith.constant 0 : i32
    return %arg0, %c0_i32, %c0_i32_0 : i32, i32, i32
  }
}

</mosaic_0001>

<llo_original>
// kernel: tpu_custom_call.1
$region0: #{tpu_custom_call.1}
  #allocation0 [shape = 'u32[]', space=smem, size = 0x4, offset = 0x4, fixed_abs, tag = 'smem constant byte address 0x4 - core index']
  #allocation1 [shape = 'u32[144,128]{1,0:T(1,128)}', space=vmem, size = 0x12000, scoped, tag = 'internal scratch']
  %s0 = inlined_call_operand.hbm [shape: f32[8,40], index: 0, kind: input, shape index: {}]
  %s1 = inlined_call_operand.vmem [shape: s32[1,1,8], index: 1, kind: input, shape index: {}]
  %s2 = inlined_call_operand.hbm [shape: f32[1,1,1], index: 2, kind: output, shape index: {}]
  %s3 = sld [smem:[#allocation0]]
  $region22: #{tpu_custom_call.1} parent=0
    _
  %s5 = ssub.s32 1, %s3
  %s6 = scalar_select 0, %s5, %s3
  $region1: #{tpu_custom_call.1} parent=0
    #allocation2 [shape = 'u8[4096]{0}', space=vmem, size = 0x1000, scoped, tag = 'input window, operand 0, single buffered']
    #allocation3 [shape = 's32[1]{0}', space=sflag, size = 0x4, scoped, tag = 'scoped memory for tpu_custom_call.1']
    #allocation4 [shape = 's32[1]{0}', space=sflag, size = 0x4, scoped, tag = 'scoped memory for tpu_custom_call.1']
    #allocation5 [shape = 'u8[512]{0}', space=vmem, size = 0x400, scoped, tag = 'output window, operand 0, single buffered']
    %7 = vsyncpa [#allocation3], 0
    %8 = vsyncpa [#allocation4], 0
    // Predicated region
    $region2: #{tpu_custom_call.1} parent=1 // pred_check
      _
    $region3: #{tpu_custom_call.1} parent=1 // pred_check_branch
      %10 = sbr.rel (0) target = $region5
    $region4: #{tpu_custom_call.1} parent=1 // pred_region
      %s12 = ssub.s32 128, 128
      %13 = vsyncadd [#allocation3], %s12
      %s15 = sshll.u32 [#allocation2], 4
      %s16 = int_to_ptr.vmem [resolvable:$true] %s15
      %18 = dma.hbm_to_vmem [thread:$0]  %s0, 128, %s16, [#allocation3]
    $region5: #{tpu_custom_call.1} parent=1 // pred_fallthru
      _
    // Predicated region
    $region6: #{tpu_custom_call.1} parent=1 // pred_check
      _
    $region7: #{tpu_custom_call.1} parent=1 // pred_check_branch
      %20 = sbr.rel (0) target = $region9
    $region8: #{tpu_custom_call.1} parent=1 // pred_region
      _
    $region9: #{tpu_custom_call.1} parent=1 // pred_fallthru
      _
    // Predicated region
    $region10: #{tpu_custom_call.1} parent=1 // pred_check
      _
    $region11: #{tpu_custom_call.1} parent=1 // pred_check_branch
      %22 = sbr.rel (0) target = $region13
    $region12: #{tpu_custom_call.1} parent=1 // pred_region
      %23 = dma.done [#allocation3], 128
    $region13: #{tpu_custom_call.1} parent=1 // pred_fallthru
      _
    %v24 = vld [vmem:[#allocation2] sm:$0xff]
    %vm25 = vcmask 326656
    %v26 = vsel %vm25, %v24, -inf
    %27 = vmax.xlane.f32.xlu0 %v26
    %v28 = vpop.xlane.xlu0 %27
    %v29 = vsub.f32 %v24, %v28
    %v30 = vmul.f32 %v29, 1.442695
    %v31 = vpow.pop %v30
    %v32 = vsel %vm25, %v31, 0.0
    %33 = vadd.xlane.f32.xlu0 %v32
    %v34 = vpop.xlane.xlu0 %33
    %v35 = vlog2.pop %v34
    %v36 = vmul.f32 %v35, 0.6931472
    %v37 = vld [vmem:[%s1] sm:$0x1]
    %38 = vxpose.xlu0.b32.start [1/16] %v37, 128
    %39 = vxpose.xlu0.b32.cont [2/16] 0, 128
    %40 = vxpose.xlu0.b32.cont [3/16] 0, 128
    %41 = vxpose.xlu0.b32.cont [4/16] 0, 128
    %42 = vxpose.xlu0.b32.cont [5/16] 0, 128
    %43 = vxpose.xlu0.b32.cont [6/16] 0, 128
    %44 = vxpose.xlu0.b32.cont [7/16] 0, 128
    %45 = vxpose.xlu0.b32.cont [8/16] 0, 128
    %46 = vxpose.xlu0.b32.cont [9/16] 0, 128
    %47 = vxpose.xlu0.b32.cont [10/16] 0, 128
    %48 = vxpose.xlu0.b32.cont [11/16] 0, 128
    %49 = vxpose.xlu0.b32.cont [12/16] 0, 128
    %50 = vxpose.xlu0.b32.cont [13/16] 0, 128
    %51 = vxpose.xlu0.b32.cont [14/16] 0, 128
    %52 = vxpose.xlu0.b32.cont [15/16] 0, 128
    %53 = vxpose.xlu0.b32.end [16/16] 0, 128
    %v54 = vpop.trf.xlu0
    %v55 = vpop.trf.xlu0
    %v56 = vpop.trf.xlu0
    %v57 = vpop.trf.xlu0
    %v58 = vpop.trf.xlu0
    %v59 = vpop.trf.xlu0
    %v60 = vpop.trf.xlu0
    %v61 = vpop.trf.xlu0
    %v62 = vpop.trf.xlu0
    %v63 = vpop.trf.xlu0
    %v64 = vpop.trf.xlu0
    %v65 = vpop.trf.xlu0
    %v66 = vpop.trf.xlu0
    %v67 = vpop.trf.xlu0
    %v68 = vpop.trf.xlu0
    %v69 = vpop.trf.xlu0
    %v70 = vlaneseq
    %v71 = vand.u32 %v70, 127
    %72 = vset.pattern.permute.xlu0 0
    %73 = vperm.xlu0 %72, %v54
    %v74 = vpop.permute.xlu0 %73
    %vm75 = vcmp.eq.s32.totalorder %v71, %v74
    %v76 = vsel %vm75, 0.99, 0.00025641025
    %v77 = vmul.f32 %v76, %v29
    %v78 = vsel %vm25, %v77, 0.0
    %79 = vadd.xlane.f32.xlu0 %v78
    %v80 = vpop.xlane.xlu0 %79
    %v81 = vsub.f32 %v80, %v36
    %v82 = vlaneseq
    %v83 = vshrl.u32 %v82, 7
    %s84 = smul.u32 0, 8
    %s85 = ssub.s32 8, %s84
    %v86 = vstv %s85
    %vm87 = vcmp.lt.s32.totalorder %v83, %v86
    %v88 = vsel %vm87, %v81, 0.0
    %v89 = vrot.slane %v88, 4
    %v90 = vadd.f32 %v88, %v89
    %v91 = vrot.slane %v90, 2
    %v92 = vadd.f32 %v90, %v91
    %v93 = vrot.slane %v92, 1
    %v94 = vadd.f32 %v92, %v93
    %vm95 = vcmask 0
    %96 = vst.msk [vmem:[#allocation5] sm:$0x1] %vm95, %v94
    // Predicated region
    $region14: #{tpu_custom_call.1} parent=1 // pred_check
      _
    $region15: #{tpu_custom_call.1} parent=1 // pred_check_branch
      %98 = sbr.rel (0) target = $region17
    $region16: #{tpu_custom_call.1} parent=1 // pred_region
      %s100 = ssub.s32 16, 16
      %101 = vsyncadd [#allocation4], %s100
      %s103 = sshll.u32 [#allocation5], 4
      %s104 = int_to_ptr.vmem [resolvable:$true] %s103
      %106 = dma.vmem_to_hbm [thread:$0]  %s104, 16, %s2, [#allocation4]
    $region17: #{tpu_custom_call.1} parent=1 // pred_fallthru
      _
    // Predicated region
    $region18: #{tpu_custom_call.1} parent=1 // pred_check
      _
    $region19: #{tpu_custom_call.1} parent=1 // pred_check_branch
      %108 = sbr.rel (0) target = $region21
    $region20: #{tpu_custom_call.1} parent=1 // pred_region
      %109 = dma.done [#allocation4], 16
    $region21: #{tpu_custom_call.1} parent=1 // pred_fallthru
      _
    %110 = vsyncpa [#allocation3], 1
    %111 = vsyncpa [#allocation4], 1

</llo_original>
